<compile_context>
chip_gen: v7x
topology: tpu7x:2x2x1
jax: 0.10.0
libtpu: 0.0.40
codegen_flags: <defaults>
</compile_context>

<pallas_src>
import math

import jax
import jax.numpy as jnp
from jax.experimental import pallas as pl
from jax.experimental.pallas import tpu as pltpu

ALPHA = 0.2                           # LeakyReLU negative slope
NEG_BIG = -9e15                       # mask value used by the PyTorch module
LANE = 128                            # TPU lane width
ROW_ALIGN = 32                        # row tile alignment (int8 sublane packing = 32)
VMEM_LIMIT_BYTES = 48 * 1024 * 1024   # explicit limit; headroom under v7x's 64 MiB VMEM


def _round_up(x, m):
    return ((x + m - 1) // m) * m


# --------------------------------------------------------------------------------------
# Kernel 1: projection (hoisted out of the attention loop).
#   h      = x @ W                         (f32 accumulate -> exact softmax logits)
#   scores = h @ a_packed                  (col 0 = a1·h_i, col 1 = a2·h_i, lane-dense)
#   h is also stored as bf16 for the big att @ h MXU matmul in kernel 2.
# --------------------------------------------------------------------------------------
def gat_proj_kernel(x_ref, w_ref, ap_ref, h_ref, s_ref):
    h = jnp.dot(x_ref[...], w_ref[...], preferred_element_type=jnp.float32)   # (TM, F_pad)
    s_ref[...] = jnp.dot(h, ap_ref[...], preferred_element_type=jnp.float32)  # (TM, 128)
    h_ref[...] = h.astype(h_ref.dtype)                                        # bf16 copy


# --------------------------------------------------------------------------------------
# Kernel 2: masked attention with ONLINE softmax over column tiles + aggregation.
#   grid = (row_tiles [parallel], col_tiles [arbitrary])
#   s_ref   : (TM, 128)    f32  -- col 0 holds f1_i = a1·h_i for this row tile
#   f2_ref  : (1, TN)      f32  -- f2_j = a2·h_j for this column tile
#   adj_ref : (TM, TN)     int8 -- adjacency mask tile (dominant HBM stream)
#   h_ref   : (TN, F_pad)  bf16 -- projected features for this column tile
#   out_ref : (TM, F_pad)  f32  -- lane-dense output tile (resident across col axis)
#   m_sc/l_sc/acc_sc : running max / sum / weighted accumulator (f32 scratch)
# --------------------------------------------------------------------------------------
def gat_attn_kernel(s_ref, f2_ref, adj_ref, h_ref, out_ref, m_sc, l_sc, acc_sc):
    j = pl.program_id(1)

    @pl.when(j == 0)
    def _():
        m_sc[...] = jnp.full(m_sc.shape, -jnp.inf, m_sc.dtype)
        l_sc[...] = jnp.zeros(l_sc.shape, l_sc.dtype)
        acc_sc[...] = jnp.zeros(acc_sc.shape, acc_sc.dtype)

    f1 = s_ref[...][:, 0:1]                               # (TM, 1)
    e = f1 + f2_ref[...]                                  # (TM, TN) logits, f32
    e = jnp.where(e > 0, e, ALPHA * e)                    # LeakyReLU (VPU)
    masked = jnp.where(adj_ref[...] != 0, e, NEG_BIG)     # adjacency mask

    m_prev = m_sc[...]
    m_new = jnp.maximum(m_prev, jnp.max(masked, axis=1, keepdims=True))   # XLU reduce
    corr = jnp.exp(m_prev - m_new)                        # exp(-inf)=0 at first tile
    p = jnp.exp(masked - m_new)                           # (TM, TN)  EUP
    l_sc[...] = corr * l_sc[...] + jnp.sum(p, axis=1, keepdims=True)
    acc_sc[...] = corr * acc_sc[...] + jnp.dot(
        p.astype(jnp.bfloat16), h_ref[...], preferred_element_type=jnp.float32)
    m_sc[...] = m_new

    # (attention dropout skipped -- inference semantics)

    @pl.when(j == pl.num_programs(1) - 1)
    def _():
        h_prime = acc_sc[...] * pl.reciprocal(l_sc[...], approx=True)     # EUP recip
        out_ref[...] = jnp.where(h_prime > 0, h_prime, jnp.exp(h_prime) - 1.0)   # ELU


def gat_forward(x, W, a, adj, *, tile_rows=256, tile_cols=1024):
    """GAT layer forward (concat=True, eval mode) via two Pallas calls."""
    N, F_in = x.shape
    F_out = W.shape[1]

    TM = min(_round_up(tile_rows, ROW_ALIGN), _round_up(N, ROW_ALIGN))   # row tile
    TN = min(_round_up(tile_cols, LANE), _round_up(N, LANE))             # column tile
    F_pad = _round_up(max(F_out, LANE), LANE)                            # lane-dense width
    N_pad = _round_up(N, math.lcm(TM, TN))                               # shared padding

    # ---- one-time padding / packing in the wrapper (outside the hot loop) ----
    x_p = jnp.zeros((N_pad, F_in), jnp.float32).at[:N, :].set(x.astype(jnp.float32))
    W_p = jnp.zeros((F_in, F_pad), jnp.float32).at[:, :F_out].set(W.astype(jnp.float32))
    a_packed = jnp.zeros((F_pad, LANE), jnp.float32)
    a_packed = a_packed.at[:F_out, 0].set(a[:F_out, 0])
    a_packed = a_packed.at[:F_out, 1].set(a[F_out:, 0])
    # adjacency is only used as a mask -> stream it as int8 (4x less HBM/VMEM than f32)
    adj_mask = jnp.zeros((N_pad, N_pad), jnp.int8).at[:N, :N].set((adj > 0).astype(jnp.int8))

    # ---- kernel 1: h = x @ W and packed attention scores (row-tiled) ----
    h_bf16, scores = pl.pallas_call(
        gat_proj_kernel,
        out_shape=(
            jax.ShapeDtypeStruct((N_pad, F_pad), jnp.bfloat16),
            jax.ShapeDtypeStruct((N_pad, LANE), jnp.float32),
        ),
        grid=(N_pad // TM,),
        in_specs=[
            pl.BlockSpec((TM, F_in), lambda i: (i, 0)),
            pl.BlockSpec((F_in, F_pad), lambda i: (0, 0)),
            pl.BlockSpec((F_pad, LANE), lambda i: (0, 0)),
        ],
        out_specs=(
            pl.BlockSpec((TM, F_pad), lambda i: (i, 0)),
            pl.BlockSpec((TM, LANE), lambda i: (i, 0)),
        ),
        compiler_params=pltpu.CompilerParams(
            dimension_semantics=("parallel",),
            vmem_limit_bytes=VMEM_LIMIT_BYTES,
        ),
    )(x_p, W_p, a_packed)

    # f2_j = a2·h_j for all j as a (1, N_pad) row vector -- a free reshape here, so no
    # (N,1)->(1,N) transpose is needed inside the hot attention loop.
    f2_row = scores[:, 1:2].reshape(1, N_pad)

    # ---- kernel 2: online-softmax masked attention + aggregation (rows x cols) ----
    out_pad = pl.pallas_call(
        gat_attn_kernel,
        out_shape=jax.ShapeDtypeStruct((N_pad, F_pad), jnp.float32),
        grid=(N_pad // TM, N_pad // TN),
        in_specs=[
            pl.BlockSpec((TM, LANE), lambda i, j: (i, 0)),     # scores (f1 in col 0)
            pl.BlockSpec((1, TN), lambda i, j: (0, j)),        # f2 column-tile row vector
            pl.BlockSpec((TM, TN), lambda i, j: (i, j)),       # int8 adjacency tile
            pl.BlockSpec((TN, F_pad), lambda i, j: (j, 0)),    # h column tile, bf16
        ],
        out_specs=pl.BlockSpec((TM, F_pad), lambda i, j: (i, 0)),   # resident across j
        scratch_shapes=[
            pltpu.VMEM((TM, 1), jnp.float32),       # running max m
            pltpu.VMEM((TM, 1), jnp.float32),       # running denom l
            pltpu.VMEM((TM, F_pad), jnp.float32),   # running accumulator
        ],
        compiler_params=pltpu.CompilerParams(
            dimension_semantics=("parallel", "arbitrary"),
            vmem_limit_bytes=VMEM_LIMIT_BYTES,
        ),
    )(scores, f2_row, adj_mask, h_bf16)

    return out_pad[:N, :F_out]


def xavier_uniform(key, shape, gain):
    fan_in, fan_out = shape[0], shape[1]
    bound = gain * math.sqrt(6.0 / (fan_in + fan_out))
    return jax.random.uniform(key, shape, jnp.float32, minval=-bound, maxval=bound)


def reference_forward(x, W, a, adj):
    """Pure-JAX f32 reference of the PyTorch forward (eval mode)."""
    h = x @ W
    N, F_out = h.shape
    a1, a2 = a[:F_out, 0], a[F_out:, 0]
    e = h @ a1[:, None] + (h @ a2[:, None]).T
    e = jnp.where(e > 0, e, ALPHA * e)
    att = jnp.where(adj > 0, e, NEG_BIG)
    att = jax.nn.softmax(att, axis=1)
    h_prime = att @ h
    return jnp.where(h_prime > 0, h_prime, jnp.exp(h_prime) - 1.0)


def _run_case(key, N, in_features, out_features, tile_rows, tile_cols, tol):
    k_x, k_w, k_a, k_adj = jax.random.split(key, 4)
    gain = 1.414
    x = jax.random.normal(k_x, (N, in_features), jnp.float32)
    W = xavier_uniform(k_w, (in_features, out_features), gain)
    a = xavier_uniform(k_a, (2 * out_features, 1), gain)
    adj = (jax.random.uniform(k_adj, (N, N)) > 0.5).astype(jnp.float32)
    adj = jnp.maximum(adj, jnp.eye(N, dtype=jnp.float32))   # self loops

    out = jax.block_until_ready(
        gat_forward(x, W, a, adj, tile_rows=tile_rows, tile_cols=tile_cols))
    ref = reference_forward(x, W, a, adj)

    assert out.shape == (N, out_features)
    err = float(jnp.max(jnp.abs(out - ref)))
    assert jnp.allclose(out, ref, atol=tol, rtol=tol), (
        f"mismatch vs JAX reference (N={N}, max abs err={err})")


if __name__ == "__main__":
    key = jax.random.PRNGKey(0)
    k1, k2, k3 = jax.random.split(key, 3)

    # Small case matching the module's natural shapes (single row/col tile).
    _run_case(k1, N=8, in_features=16, out_features=32, tile_rows=256, tile_cols=1024, tol=2e-2)
    # Multi-row-tile case: exercises the row-tiled grid + row/column padding path.
    _run_case(k2, N=90, in_features=16, out_features=32, tile_rows=32, tile_cols=1024, tol=2e-2)
    # Multi-row + multi-column tile case: exercises the flash-style online softmax.
    _run_case(k3, N=300, in_features=16, out_features=32, tile_rows=128, tile_cols=128, tol=2e-2)

    print("KERNEL_OK")
</pallas_src>

<mosaic_0001>
module attributes {stable_mosaic.version = 11 : i64} {
  func.func @gat_proj_kernel(%arg0: i32, %arg1: memref<32x16xf32, #tpu.memory_space<vmem>>, %arg2: memref<16x128xf32, #tpu.memory_space<vmem>>, %arg3: memref<128x128xf32, #tpu.memory_space<vmem>>, %arg4: memref<32x128xbf16, #tpu.memory_space<vmem>>, %arg5: memref<32x128xf32, #tpu.memory_space<vmem>>) attributes {dimension_semantics = [#tpu.dimension_semantics<parallel>], iteration_bounds = array<i64: 4>, scalar_prefetch = 0 : i64, scratch_operands = 0 : i64, tpu.core_type = #tpu.core_type<tc>, window_params = [{transform_indices = @transform_0, window_bounds = array<i64: 32, 16>}, {pipeline_mode = #tpu.pipeline_mode<synchronous>, transform_indices = @transform_1, window_bounds = array<i64: 16, 128>}, {pipeline_mode = #tpu.pipeline_mode<synchronous>, transform_indices = @transform_2, window_bounds = array<i64: 128, 128>}, {transform_indices = @transform_3, window_bounds = array<i64: 32, 128>}, {transform_indices = @transform_4, window_bounds = array<i64: 32, 128>}]} {
    %c0 = arith.constant 0 : index
    %c0_0 = arith.constant 0 : index
    %0 = vector.load %arg1[%c0, %c0_0] : memref<32x16xf32, #tpu.memory_space<vmem>>, vector<32x16xf32>
    %c0_1 = arith.constant 0 : index
    %c0_2 = arith.constant 0 : index
    %1 = vector.load %arg2[%c0_1, %c0_2] : memref<16x128xf32, #tpu.memory_space<vmem>>, vector<16x128xf32>
    %cst = arith.constant dense<0.000000e+00> : vector<32x128xf32>
    %2 = tpu.matmul %0, %1, %cst {dimension_numbers = #tpu.dot_dimension_numbers<[1], [0], [0], [1], [0, 0, 1, 1], [], []>} : vector<32x16xf32>, vector<16x128xf32>, vector<32x128xf32> -> vector<32x128xf32>
    %c0_3 = arith.constant 0 : index
    %c0_4 = arith.constant 0 : index
    %3 = vector.load %arg3[%c0_3, %c0_4] : memref<128x128xf32, #tpu.memory_space<vmem>>, vector<128x128xf32>
    %cst_5 = arith.constant dense<0.000000e+00> : vector<32x128xf32>
    %4 = tpu.matmul %2, %3, %cst_5 {dimension_numbers = #tpu.dot_dimension_numbers<[1], [0], [0], [1], [0, 0, 1, 1], [], []>} : vector<32x128xf32>, vector<128x128xf32>, vector<32x128xf32> -> vector<32x128xf32>
    %c0_6 = arith.constant 0 : index
    %c0_7 = arith.constant 0 : index
    %5 = vector.load %arg5[%c0_6, %c0_7] : memref<32x128xf32, #tpu.memory_space<vmem>>, vector<32x128xf32>
    tpu.vector_store %arg5[%c0_6, %c0_7], %4 {strides = array<i32>} : memref<32x128xf32, #tpu.memory_space<vmem>>, vector<32x128xf32>,
    %6 = arith.truncf %2 : vector<32x128xf32> to vector<32x128xbf16>
    %c0_8 = arith.constant 0 : index
    %c0_9 = arith.constant 0 : index
    %7 = vector.load %arg4[%c0_8, %c0_9] : memref<32x128xbf16, #tpu.memory_space<vmem>>, vector<32x128xbf16>
    tpu.vector_store %arg4[%c0_8, %c0_9], %6 {strides = array<i32>} : memref<32x128xbf16, #tpu.memory_space<vmem>>, vector<32x128xbf16>,
    return
  }
  func.func @transform_0(%arg0: i32) -> (i32, i32) {
    %c0_i32 = arith.constant 0 : i32
    %c0_i32_0 = arith.constant 0 : i32
    return %arg0, %c0_i32 : i32, i32
  }
  func.func @transform_1(%arg0: i32) -> (i32, i32) {
    %c0_i32 = arith.constant 0 : i32
    %c0_i32_0 = arith.constant 0 : i32
    %c0_i32_1 = arith.constant 0 : i32
    return %c0_i32, %c0_i32_0 : i32, i32
  }
  func.func @transform_2(%arg0: i32) -> (i32, i32) {
    %c0_i32 = arith.constant 0 : i32
    %c0_i32_0 = arith.constant 0 : i32
    %c0_i32_1 = arith.constant 0 : i32
    return %c0_i32, %c0_i32_0 : i32, i32
  }
  func.func @transform_3(%arg0: i32) -> (i32, i32) {
    %c0_i32 = arith.constant 0 : i32
    %c0_i32_0 = arith.constant 0 : i32
    return %arg0, %c0_i32 : i32, i32
  }
  func.func @transform_4(%arg0: i32) -> (i32, i32) {
    %c0_i32 = arith.constant 0 : i32
    %c0_i32_0 = arith.constant 0 : i32
    return %arg0, %c0_i32 : i32, i32
  }
}

</mosaic_0001>

<llo_original>
// kernel: tpu_custom_call.1
$region0: #{tpu_custom_call.1}
  #allocation0 [shape = 'u32[]', space=smem, size = 0x4, offset = 0x4, fixed_abs, tag = 'smem constant byte address 0x4 - core index']
  #allocation1 [shape = 'u32[144,128]{1,0:T(1,128)}', space=vmem, size = 0x12000, scoped, tag = 'internal scratch']
  %s0 = inlined_call_operand.vmem [shape: f32[128,16], index: 0, kind: input, shape index: {}]
  %s1 = inlined_call_operand.vmem [shape: f32[16,128], index: 1, kind: input, shape index: {}]
  %s2 = inlined_call_operand.vmem [shape: f32[128,128], index: 2, kind: input, shape index: {}]
  %s3 = inlined_call_operand.hbm [shape: bf16[128,128], index: 3, kind: output, shape index: {0}]
  %s4 = inlined_call_operand.hbm [shape: f32[128,128], index: 4, kind: output, shape index: {1}]
  %5 = xla_tuple %s3, %s4
  %s6 = sld [smem:[#allocation0]]
  $region53: #{tpu_custom_call.1} parent=0
    _
  %s8 = ssub.s32 1, %s6
  %s9 = scalar_select 0, %s8, %s6
  $region1: #{tpu_custom_call.1} parent=0
    #allocation2 [shape = 'u8[16384]{0}', space=vmem, size = 0x4000, scoped, tag = 'output window, operand 0']
    #allocation3 [shape = 's32[2]{0}', space=sflag, size = 0x8, scoped, tag = 'scoped memory for tpu_custom_call.1']
    #allocation4 [shape = 'u8[32768]{0}', space=vmem, size = 0x8000, scoped, tag = 'output window, operand 1']
    #allocation5 [shape = 's32[2]{0}', space=sflag, size = 0x8, scoped, tag = 'scoped memory for tpu_custom_call.1']
    %10 = vsyncpa [#allocation3], 0
    %s11 = scalar_lea.sflag [#allocation3], 1
    %12 = vsyncpa %s11, 0
    %13 = vsyncpa [#allocation5], 0
    %s14 = scalar_lea.sflag [#allocation5], 1
    %15 = vsyncpa %s14, 0
    loop: start=0, step=1, limit=6
    $region2: #{tpu_custom_call.1} parent=1 // loop_pre_header
      _
    $region3: #{tpu_custom_call.1} parent=1 // loop_header
      %s17 = sphi 0, %s21
      %p18 = scmp.ge.s32.totalorder %s17, 6
      %s27 = sphi 0, %s29
      %s30 = sphi 0, %s27
      %s31 = sphi 0, %s30
      %s47 = sphi 0, %s31
      %s51 = sphi 0, %s51
      %s53 = sphi 0, %s51
      %s54 = sphi 0, %s53
      %s68 = sphi 0, %s54
      %s72 = sphi 0, %s72
      %s74 = sphi 0, %s72
      %s75 = sphi 0, %s74
      %s89 = sphi 0, %s75
      %s95 = sphi 0, %s97
      %s98 = sphi 0, %s95
      %s99 = sphi 0, %s98
      %s115 = sphi 0, %s99
      %s121 = sphi 0, %s123
      %s124 = sphi 0, %s121
      %s125 = sphi 0, %s124
      %s141 = sphi 0, %s125
    $region4: #{tpu_custom_call.1} parent=1 // loop_header_branch
      %20 = sbr.rel (%p18) target = $region8
    $region5: #{tpu_custom_call.1} parent=1 // loop_body
      %s22 = ssub.s32 %s17, 1
      %s23 = ssub.s32 %s17, 2
      %s24 = sadd.s32 %s17, 1
      %s25 = ssub.s32 %s17, %s24
      %p26 = scmp.eq.s32.totalorder %s25, 0
      %s28 = sadd.s32 %s27, 1
      %s29 = scalar_select %p26, %s27, %s28
      %p32 = pneg %p26
      %p33 = scmp.eq.s32.totalorder %s17, 3
      %p34 = por %p32, %p33
      %p35 = scmp.ne.s32.totalorder %s27, %s30
      %p36 = scmp.eq.s32.totalorder %s17, 0
      %p37 = por %p35, %p36
      %p38 = scmp.ne.s32.totalorder %s27, %s30
      %p39 = scmp.eq.s32.totalorder %s22, 3
      %p40 = por %p38, %p39
      %p41 = scmp.ne.s32.totalorder %s30, %s31
      %p42 = scmp.eq.s32.totalorder %s22, 0
      %p43 = por %p41, %p42
      %p44 = scmp.ne.s32.totalorder %s30, %s31
      %p45 = scmp.eq.s32.totalorder %s23, 3
      %p46 = por %p44, %p45
      %p48 = scmp.ne.s32.totalorder %s31, %s47
      %p49 = scmp.eq.s32.totalorder %s23, 0
      %p50 = por %p48, %p49
      %s52 = sadd.s32 %s51, 1
      %p55 = scmp.eq.s32.totalorder %s17, 3
      %p56 = scmp.ne.s32.totalorder %s51, %s53
      %p57 = scmp.eq.s32.totalorder %s17, 0
      %p58 = por %p56, %p57
      %p59 = scmp.ne.s32.totalorder %s51, %s53
      %p60 = scmp.eq.s32.totalorder %s22, 3
      %p61 = por %p59, %p60
      %p62 = scmp.ne.s32.totalorder %s53, %s54
      %p63 = scmp.eq.s32.totalorder %s22, 0
      %p64 = por %p62, %p63
      %p65 = scmp.ne.s32.totalorder %s53, %s54
      %p66 = scmp.eq.s32.totalorder %s23, 3
      %p67 = por %p65, %p66
      %p69 = scmp.ne.s32.totalorder %s54, %s68
      %p70 = scmp.eq.s32.totalorder %s23, 0
      %p71 = por %p69, %p70
      %s73 = sadd.s32 %s72, 1
      %p76 = scmp.eq.s32.totalorder %s17, 3
      %p77 = scmp.ne.s32.totalorder %s72, %s74
      %p78 = scmp.eq.s32.totalorder %s17, 0
      %p79 = por %p77, %p78
      %p80 = scmp.ne.s32.totalorder %s72, %s74
      %p81 = scmp.eq.s32.totalorder %s22, 3
      %p82 = por %p80, %p81
      %p83 = scmp.ne.s32.totalorder %s74, %s75
      %p84 = scmp.eq.s32.totalorder %s22, 0
      %p85 = por %p83, %p84
      %p86 = scmp.ne.s32.totalorder %s74, %s75
      %p87 = scmp.eq.s32.totalorder %s23, 3
      %p88 = por %p86, %p87
      %p90 = scmp.ne.s32.totalorder %s75, %s89
      %p91 = scmp.eq.s32.totalorder %s23, 0
      %p92 = por %p90, %p91
      %s93 = ssub.s32 %s17, %s24
      %p94 = scmp.eq.s32.totalorder %s93, 0
      %s96 = sadd.s32 %s95, 1
      %s97 = scalar_select %p94, %s95, %s96
      %p100 = pneg %p94
      %p101 = scmp.eq.s32.totalorder %s17, 3
      %p102 = por %p100, %p101
      %p103 = scmp.ne.s32.totalorder %s95, %s98
      %p104 = scmp.eq.s32.totalorder %s17, 0
      %p105 = por %p103, %p104
      %p106 = scmp.ne.s32.totalorder %s95, %s98
      %p107 = scmp.eq.s32.totalorder %s22, 3
      %p108 = por %p106, %p107
      %p109 = scmp.ne.s32.totalorder %s98, %s99
      %p110 = scmp.eq.s32.totalorder %s22, 0
      %p111 = por %p109, %p110
      %p112 = scmp.ne.s32.totalorder %s98, %s99
      %p113 = scmp.eq.s32.totalorder %s23, 3
      %p114 = por %p112, %p113
      %p116 = scmp.ne.s32.totalorder %s99, %s115
      %p117 = scmp.eq.s32.totalorder %s23, 0
      %p118 = por %p116, %p117
      %s119 = ssub.s32 %s17, %s24
      %p120 = scmp.eq.s32.totalorder %s119, 0
      %s122 = sadd.s32 %s121, 1
      %s123 = scalar_select %p120, %s121, %s122
      %p126 = pneg %p120
      %p127 = scmp.eq.s32.totalorder %s17, 3
      %p128 = por %p126, %p127
      %p129 = scmp.ne.s32.totalorder %s121, %s124
      %p130 = scmp.eq.s32.totalorder %s17, 0
      %p131 = por %p129, %p130
      %p132 = scmp.ne.s32.totalorder %s121, %s124
      %p133 = scmp.eq.s32.totalorder %s22, 3
      %p134 = por %p132, %p133
      %p135 = scmp.ne.s32.totalorder %s124, %s125
      %p136 = scmp.eq.s32.totalorder %s22, 0
      %p137 = por %p135, %p136
      %p138 = scmp.ne.s32.totalorder %s124, %s125
      %p139 = scmp.eq.s32.totalorder %s23, 3
      %p140 = por %p138, %p139
      %p142 = scmp.ne.s32.totalorder %s125, %s141
      %p143 = scmp.eq.s32.totalorder %s23, 0
      %p144 = por %p142, %p143
      %p145 = scmp.le.s32.totalorder 1, %s17
      %p146 = scmp.lt.s32.totalorder %s17, 5
      %p147 = pnand %p145, %p146
      %p148 = pneg %p147
      // Predicated region
      $region9: #{tpu_custom_call.1} parent=5 // pred_check
        _
      $region10: #{tpu_custom_call.1} parent=5 // pred_check_branch
        %150 = sbr.rel (%p147) target = $region12
      $region11: #{tpu_custom_call.1} parent=5 // pred_region
        %s151 = ssub.s32 %s17, 1
        // Predicated region
        $region13: #{tpu_custom_call.1} parent=11 // pred_check
          %p152 = pneg %p64
        $region14: #{tpu_custom_call.1} parent=11 // pred_check_branch
          %154 = sbr.rel (%p152) target = $region16
        $region15: #{tpu_custom_call.1} parent=11 // pred_region
          _
        $region16: #{tpu_custom_call.1} parent=11 // pred_fallthru
          _
        // Predicated region
        $region17: #{tpu_custom_call.1} parent=11 // pred_check
          %p155 = pneg %p85
        $region18: #{tpu_custom_call.1} parent=11 // pred_check_branch
          %157 = sbr.rel (%p155) target = $region20
        $region19: #{tpu_custom_call.1} parent=11 // pred_region
          _
        $region20: #{tpu_custom_call.1} parent=11 // pred_fallthru
          _
      $region12: #{tpu_custom_call.1} parent=5 // pred_fallthru
        _
      %p158 = scmp.lt.s32.totalorder %s17, 4
      // Predicated region
      $region21: #{tpu_custom_call.1} parent=5 // pred_check
        %p159 = pneg %p158
      $region22: #{tpu_custom_call.1} parent=5 // pred_check_branch
        %161 = sbr.rel (%p159) target = $region24
      $region23: #{tpu_custom_call.1} parent=5 // pred_region
        // Predicated region
        $region25: #{tpu_custom_call.1} parent=23 // pred_check
          %p162 = pneg %p37
        $region26: #{tpu_custom_call.1} parent=23 // pred_check_branch
          %164 = sbr.rel (%p162) target = $region28
        $region27: #{tpu_custom_call.1} parent=23 // pred_region
          %s165 = smul.u32 4, %s17
          %p166 = scmp.lt.s32.totalorder %s165, 15
          %s167 = scalar_select %p166, %s165, 15
          %s168 = smul.addr %s167, 8
          %s169 = scalar_lea.vmem %s0, %s168
          %s170 = smul.u32 4, %s17
        $region28: #{tpu_custom_call.1} parent=23 // pred_fallthru
          _
      $region24: #{tpu_custom_call.1} parent=5 // pred_fallthru
        _
      %p171 = scmp.le.s32.totalorder 1, %s17
      %p172 = scmp.lt.s32.totalorder %s17, 5
      %p173 = pnand %p171, %p172
      %p174 = pneg %p173
      // Predicated region
      $region29: #{tpu_custom_call.1} parent=5 // pred_check
        _
      $region30: #{tpu_custom_call.1} parent=5 // pred_check_branch
        %176 = sbr.rel (%p173) target = $region32
      $region31: #{tpu_custom_call.1} parent=5 // pred_region
        %s177 = ssub.s32 %s17, 1
        %s178 = smul.u32 4, %s22
        %p179 = scmp.lt.s32.totalorder %s178, 15
        %s180 = scalar_select %p179, %s178, 15
        %s181 = smul.addr %s180, 8
        %s182 = scalar_lea.vmem %s0, %s181
        %p183 = pneg %p43
        %p184 = pneg %p40
        %p185 = pneg %p64
        %p186 = pneg %p61
        %p187 = pneg %p85
        %p188 = pneg %p82
        %p189 = pneg %p111
        %p190 = pneg %p108
        %s191 = sand.u32 %s98, 1
        %s192 = scalar_lea.sflag [#allocation3], %s191
        %s193 = sand.u32 %s98, 1
        %s194 = smul.addr %s193, 16
        %s195 = scalar_lea.vmem [#allocation2], %s194
        %p196 = pneg %p137
        %p197 = pneg %p134
        %s198 = sand.u32 %s124, 1
        %s199 = scalar_lea.sflag [#allocation5], %s198
        %s200 = sand.u32 %s124, 1
        %s201 = smul.addr %s200, 32
        %s202 = scalar_lea.vmem [#allocation4], %s201
        %s203 = smul.u32 4, %s22
        %p204 = scmp.lt.s32.totalorder %s203, 15
        %s205 = scalar_select %p204, %s203, 15
        %s206 = smul.addr %s205, 8
        %s207 = scalar_lea.vmem %s0, %s206
        %s208 = smul.u32 4, %s22
        %s209 = smul.u32 4, %s22
        %s210 = smul.u32 4, %s22
        %v211 = vld [vmem:[%s207] sm:$0xff]
        %v212 = vld [vmem:[%s207 + $0x8] sm:$0xff]
        %v213 = vld [vmem:[%s207 + $0x10] sm:$0xff]
        %v214 = vld [vmem:[%s207 + $0x18] sm:$0xff]
        %v215 = vld [vmem:[%s1] sm:$0xff]
        %v216 = vld [vmem:[%s1 + $0x8] sm:$0xff]
        %vm217 = vcmask 130048
        %v219 = vsel %vm217, %v211, 0
        %v222 = vsel %vm217, %v212, 0
        %v225 = vsel %vm217, %v213, 0
        %v228 = vsel %vm217, %v214, 0
        %230 = vmatprep.subr.mxu0 0.0
        %231 = vmatpush1.msra.mxu0 %v215
        %232 = vmatprep.subr.mxu0 0.0
        %233 = vmatpush1.msra.mxu0 %v216
        %234 = vmatprep.subr.mxu0 0.0
        %235 = vmatpush1.msra.mxu0 0.0
        %236 = vmatprep.subr.mxu0 0.0
        %237 = vmatpush1.msra.mxu0 0.0
        %238 = vmatprep.subr.mxu0 0.0
        %239 = vmatpush1.msra.mxu0 0.0
        %240 = vmatprep.subr.mxu0 0.0
        %241 = vmatpush1.msra.mxu0 0.0
        %242 = vmatprep.subr.mxu0 0.0
        %243 = vmatpush1.msra.mxu0 0.0
        %244 = vmatprep.subr.mxu0 0.0
        %245 = vmatpush1.msra.mxu0 0.0
        %246 = vmatprep.subr.mxu0 0.0
        %247 = vmatpush1.msra.mxu0 0.0
        %248 = vmatprep.subr.mxu0 0.0
        %249 = vmatpush1.msra.mxu0 0.0
        %250 = vmatprep.subr.mxu0 0.0
        %251 = vmatpush1.msra.mxu0 0.0
        %252 = vmatprep.subr.mxu0 0.0
        %253 = vmatpush1.msra.mxu0 0.0
        %254 = vmatprep.subr.mxu0 0.0
        %255 = vmatpush1.msra.mxu0 0.0
        %256 = vmatprep.subr.mxu0 0.0
        %257 = vmatpush1.msra.mxu0 0.0
        %258 = vmatprep.subr.mxu0 0.0
        %259 = vmatpush1.msra.mxu0 0.0
        %260 = vmatprep.subr.mxu0 0.0
        %261 = vmatpush1.msra.mxu0 0.0
        %262 = vmatprep.subr.mxu0 0.0
        %263 = vmatpush1.msra.mxu0 0.0
        %264 = vmatprep.subr.mxu0 0.0
        %265 = vmatpush1.msra.mxu0 0.0
        %266 = vmatprep.subr.mxu0 0.0
        %267 = vmatpush1.msra.mxu0 0.0
        %268 = vmatprep.subr.mxu0 0.0
        %269 = vmatpush1.msra.mxu0 0.0
        %270 = vmatprep.subr.mxu0 0.0
        %271 = vmatpush1.msra.mxu0 0.0
        %272 = vmatprep.subr.mxu0 0.0
        %273 = vmatpush1.msra.mxu0 0.0
        %274 = vmatprep.subr.mxu0 0.0
        %275 = vmatpush1.msra.mxu0 0.0
        %276 = vmatprep.subr.mxu0 0.0
        %277 = vmatpush1.msra.mxu0 0.0
        %278 = vmatprep.subr.mxu0 0.0
        %279 = vmatpush1.msra.mxu0 0.0
        %280 = vmatprep.subr.mxu0 0.0
        %281 = vmatpush1.msra.mxu0 0.0
        %282 = vmatprep.subr.mxu0 0.0
        %283 = vmatpush1.msra.mxu0 0.0
        %284 = vmatprep.subr.mxu0 0.0
        %285 = vmatpush1.msra.mxu0 0.0
        %286 = vmatprep.subr.mxu0 0.0
        %287 = vmatpush1.msra.mxu0 0.0
        %288 = vmatprep.subr.mxu0 0.0
        %289 = vmatpush1.msra.mxu0 0.0
        %290 = vmatprep.subr.mxu0 0.0
        %291 = vmatpush1.msra.mxu0 0.0
        %292 = vmatprep.subr.mxu0 0.0
        %293 = vmatpush1.msra.mxu0 0.0
        %294 = vmatprep.mubr.f32.mxu0 0.0
        %295 = vmatmul.mubr.f32.gmra.mrb[0].mxu0 %v219
        %v296 = vpop.f32.mrb[0].mxu0
        %v297 = vadd.f32 0.0, %v296
        %v298 = vpop.f32.mrb[0].mxu0
        %299 = vmatprep.mubr.f32.mxu0 0.0
        %300 = vmatmul.mubr.f32.gmra.mrb[0].mxu0 %v222
        %v301 = vpop.f32.mrb[0].mxu0
        %v302 = vadd.f32 0.0, %v301
        %v303 = vpop.f32.mrb[0].mxu0
        %304 = vmatprep.mubr.f32.mxu0 0.0
        %305 = vmatmul.mubr.f32.gmra.mrb[0].mxu0 %v225
        %v306 = vpop.f32.mrb[0].mxu0
        %v307 = vadd.f32 0.0, %v306
        %v308 = vpop.f32.mrb[0].mxu0
        %309 = vmatprep.mubr.f32.mxu0 0.0
        %310 = vmatmul.mubr.f32.gmra.mrb[0].mxu0 %v228
        %v311 = vpop.f32.mrb[0].mxu0
        %v312 = vadd.f32 0.0, %v311
        %v313 = vpop.f32.mrb[0].mxu0
        %314 = vdwg.mxu0
        %v315 = vld [vmem:[%s2] sm:$0xff]
        %v316 = vld [vmem:[%s2 + $0x8] sm:$0xff]
        %v317 = vld [vmem:[%s2 + $0x10] sm:$0xff]
        %v318 = vld [vmem:[%s2 + $0x18] sm:$0xff]
        %v319 = vld [vmem:[%s2 + $0x20] sm:$0xff]
        %v320 = vld [vmem:[%s2 + $0x28] sm:$0xff]
        %v321 = vld [vmem:[%s2 + $0x30] sm:$0xff]
        %v322 = vld [vmem:[%s2 + $0x38] sm:$0xff]
        %v323 = vld [vmem:[%s2 + $0x40] sm:$0xff]
        %v324 = vld [vmem:[%s2 + $0x48] sm:$0xff]
        %v325 = vld [vmem:[%s2 + $0x50] sm:$0xff]
        %v326 = vld [vmem:[%s2 + $0x58] sm:$0xff]
        %v327 = vld [vmem:[%s2 + $0x60] sm:$0xff]
        %v328 = vld [vmem:[%s2 + $0x68] sm:$0xff]
        %v329 = vld [vmem:[%s2 + $0x70] sm:$0xff]
        %v330 = vld [vmem:[%s2 + $0x78] sm:$0xff]
        %331 = vmatprep.subr.mxu0 0.0
        %332 = vmatpush1.msra.mxu0 %v315
        %333 = vmatprep.subr.mxu0 0.0
        %334 = vmatpush1.msra.mxu0 %v316
        %335 = vmatprep.subr.mxu0 0.0
        %336 = vmatpush1.msra.mxu0 %v317
        %337 = vmatprep.subr.mxu0 0.0
        %338 = vmatpush1.msra.mxu0 %v318
        %339 = vmatprep.subr.mxu0 0.0
        %340 = vmatpush1.msra.mxu0 %v319
        %341 = vmatprep.subr.mxu0 0.0
        %342 = vmatpush1.msra.mxu0 %v320
        %343 = vmatprep.subr.mxu0 0.0
        %344 = vmatpush1.msra.mxu0 %v321
        %345 = vmatprep.subr.mxu0 0.0
        %346 = vmatpush1.msra.mxu0 %v322
        %347 = vmatprep.subr.mxu0 0.0
        %348 = vmatpush1.msra.mxu0 %v323
        %349 = vmatprep.subr.mxu0 0.0
        %350 = vmatpush1.msra.mxu0 %v324
        %351 = vmatprep.subr.mxu0 0.0
        %352 = vmatpush1.msra.mxu0 %v325
        %353 = vmatprep.subr.mxu0 0.0
        %354 = vmatpush1.msra.mxu0 %v326
        %355 = vmatprep.subr.mxu0 0.0
        %356 = vmatpush1.msra.mxu0 %v327
        %357 = vmatprep.subr.mxu0 0.0
        %358 = vmatpush1.msra.mxu0 %v328
        %359 = vmatprep.subr.mxu0 0.0
        %360 = vmatpush1.msra.mxu0 %v329
        %361 = vmatprep.subr.mxu0 0.0
        %362 = vmatpush1.msra.mxu0 %v330
        %363 = vmatprep.subr.mxu0 0.0
        %364 = vmatpush1.msra.mxu0 0.0
        %365 = vmatprep.subr.mxu0 0.0
        %366 = vmatpush1.msra.mxu0 0.0
        %367 = vmatprep.subr.mxu0 0.0
        %368 = vmatpush1.msra.mxu0 0.0
        %369 = vmatprep.subr.mxu0 0.0
        %370 = vmatpush1.msra.mxu0 0.0
        %371 = vmatprep.subr.mxu0 0.0
        %372 = vmatpush1.msra.mxu0 0.0
        %373 = vmatprep.subr.mxu0 0.0
        %374 = vmatpush1.msra.mxu0 0.0
        %375 = vmatprep.subr.mxu0 0.0
        %376 = vmatpush1.msra.mxu0 0.0
        %377 = vmatprep.subr.mxu0 0.0
        %378 = vmatpush1.msra.mxu0 0.0
        %379 = vmatprep.subr.mxu0 0.0
        %380 = vmatpush1.msra.mxu0 0.0
        %381 = vmatprep.subr.mxu0 0.0
        %382 = vmatpush1.msra.mxu0 0.0
        %383 = vmatprep.subr.mxu0 0.0
        %384 = vmatpush1.msra.mxu0 0.0
        %385 = vmatprep.subr.mxu0 0.0
        %386 = vmatpush1.msra.mxu0 0.0
        %387 = vmatprep.subr.mxu0 0.0
        %388 = vmatpush1.msra.mxu0 0.0
        %389 = vmatprep.subr.mxu0 0.0
        %390 = vmatpush1.msra.mxu0 0.0
        %391 = vmatprep.subr.mxu0 0.0
        %392 = vmatpush1.msra.mxu0 0.0
        %393 = vmatprep.subr.mxu0 0.0
        %394 = vmatpush1.msra.mxu0 0.0
        %395 = vmatprep.mubr.f32.mxu0 0.0
        %396 = vmatmul.mubr.f32.gmra.mrb[0].mxu0 %v297
        %v397 = vpop.f32.mrb[0].mxu0
        %v398 = vadd.f32 0.0, %v397
        %v399 = vpop.f32.mrb[0].mxu0
        %400 = vmatprep.mubr.f32.mxu0 0.0
        %401 = vmatmul.mubr.f32.gmra.mrb[0].mxu0 %v302
        %v402 = vpop.f32.mrb[0].mxu0
        %v403 = vadd.f32 0.0, %v402
        %v404 = vpop.f32.mrb[0].mxu0
        %405 = vmatprep.mubr.f32.mxu0 0.0
        %406 = vmatmul.mubr.f32.gmra.mrb[0].mxu0 %v307
        %v407 = vpop.f32.mrb[0].mxu0
        %v408 = vadd.f32 0.0, %v407
        %v409 = vpop.f32.mrb[0].mxu0
        %410 = vmatprep.mubr.f32.mxu0 0.0
        %411 = vmatmul.mubr.f32.gmra.mrb[0].mxu0 %v312
        %v412 = vpop.f32.mrb[0].mxu0
        %v413 = vadd.f32 0.0, %v412
        %v414 = vpop.f32.mrb[0].mxu0
        %415 = vdwg.mxu0
        %416 = vst [vmem:[%s202] sm:$0xff] %v398
        %417 = vst [vmem:[%s202 + $0x8] sm:$0xff] %v403
        %418 = vst [vmem:[%s202 + $0x10] sm:$0xff] %v408
        %419 = vst [vmem:[%s202 + $0x18] sm:$0xff] %v413
        %v420 = vpack.c.bf16 %v302, %v297
        %v421 = vpack.c.bf16 %v312, %v307
        %v424 = vunpack.c.l.b16 %v420
        %v425 = vunpack.c.h.b16 %v420
        %v426 = vunpack.c.l.b16 %v421
        %v427 = vunpack.c.h.b16 %v421
        %v428 = vpack.c.b16 %v424, %v424
        %v429 = vpack.c.b16 %v425, %v425
        %v430 = vpack.c.b16 %v426, %v426
        %v431 = vpack.c.b16 %v427, %v427
        %436 = vst [vmem:[%s195] sm:$0xf] %v428
        %437 = vst [vmem:[%s195 + $0x4] sm:$0xf] %v429
        %438 = vst [vmem:[%s195 + $0x8] sm:$0xf] %v430
        %439 = vst [vmem:[%s195 + $0xc] sm:$0xf] %v431
        %s440 = sand.u32 %s98, 1
        %s441 = scalar_lea.sflag [#allocation3], %s440
        %s442 = sand.u32 %s98, 1
        %s443 = smul.addr %s442, 16
        %s444 = scalar_lea.vmem [#allocation2], %s443
        %s445 = sand.u32 %s124, 1
        %s446 = scalar_lea.sflag [#allocation5], %s445
        %s447 = sand.u32 %s124, 1
        %s448 = smul.addr %s447, 32
        %s449 = scalar_lea.vmem [#allocation4], %s448
        // Predicated region
        $region33: #{tpu_custom_call.1} parent=31 // pred_check
          %p450 = pneg %p108
        $region34: #{tpu_custom_call.1} parent=31 // pred_check_branch
          %452 = sbr.rel (%p450) target = $region36
        $region35: #{tpu_custom_call.1} parent=31 // pred_region
          %s453 = smul.u32 4, %s22
          %s455 = ssub.s32 256, 256
          %456 = vsyncadd %s441, %s455
          %s457 = smul.addr %s453, 64
          %s458 = scalar_lea.hbm %s3, %s457
          %s459 = sshll.u32 %s444, 4
          %s460 = int_to_ptr.vmem [resolvable:$true] %s459
          %465 = dma.vmem_to_hbm [thread:$0]  %s460, 256, %s458, %s441, 64, 64, 4
        $region36: #{tpu_custom_call.1} parent=31 // pred_fallthru
          _
        // Predicated region
        $region37: #{tpu_custom_call.1} parent=31 // pred_check
          %p466 = pneg %p134
        $region38: #{tpu_custom_call.1} parent=31 // pred_check_branch
          %468 = sbr.rel (%p466) target = $region40
        $region39: #{tpu_custom_call.1} parent=31 // pred_region
          %s469 = smul.u32 4, %s22
          %s471 = ssub.s32 512, 512
          %472 = vsyncadd %s446, %s471
          %s473 = smul.addr %s469, 128
          %s474 = scalar_lea.hbm %s4, %s473
          %s475 = sshll.u32 %s449, 4
          %s476 = int_to_ptr.vmem [resolvable:$true] %s475
          %481 = dma.vmem_to_hbm [thread:$0]  %s476, 512, %s474, %s446, 128, 128, 8
        $region40: #{tpu_custom_call.1} parent=31 // pred_fallthru
          _
      $region32: #{tpu_custom_call.1} parent=5 // pred_fallthru
        _
      %p482 = scmp.le.s32.totalorder 2, %s17
      // Predicated region
      $region41: #{tpu_custom_call.1} parent=5 // pred_check
        %p483 = pneg %p482
      $region42: #{tpu_custom_call.1} parent=5 // pred_check_branch
        %485 = sbr.rel (%p483) target = $region44
      $region43: #{tpu_custom_call.1} parent=5 // pred_region
        %s486 = ssub.s32 %s17, 2
        // Predicated region
        $region45: #{tpu_custom_call.1} parent=43 // pred_check
          %p487 = pneg %p114
        $region46: #{tpu_custom_call.1} parent=43 // pred_check_branch
          %489 = sbr.rel (%p487) target = $region48
        $region47: #{tpu_custom_call.1} parent=43 // pred_region
          %s490 = sand.u32 %s99, 1
          %s491 = scalar_lea.sflag [#allocation3], %s490
          %s492 = sand.u32 %s99, 1
          %s493 = smul.addr %s492, 16
          %s494 = scalar_lea.vmem [#allocation2], %s493
          %495 = dma.done %s491, 256
        $region48: #{tpu_custom_call.1} parent=43 // pred_fallthru
          _
        // Predicated region
        $region49: #{tpu_custom_call.1} parent=43 // pred_check
          %p496 = pneg %p140
        $region50: #{tpu_custom_call.1} parent=43 // pred_check_branch
          %498 = sbr.rel (%p496) target = $region52
        $region51: #{tpu_custom_call.1} parent=43 // pred_region
          %s499 = sand.u32 %s125, 1
          %s500 = scalar_lea.sflag [#allocation5], %s499
          %s501 = sand.u32 %s125, 1
          %s502 = smul.addr %s501, 32
          %s503 = scalar_lea.vmem [#allocation4], %s502
          %504 = dma.done %s500, 512
        $region52: #{tpu_custom_call.1} parent=43 // pred_fallthru
          _
      $region44: #{tpu_custom_call.1} parent=5 // pred_fallthru
        _
    $region6: #{tpu_custom_call.1} parent=1 // loop_footer
      %s21 = sadd.s32 1, %s17
    $region7: #{tpu_custom_call.1} parent=1 // loop_footer_branch
      %16 = sbr.rel target = $region3
    $region8: #{tpu_custom_call.1} parent=1 // loop_exit
      _
    %505 = vsyncpa [#allocation3], 1
    %s506 = scalar_lea.sflag [#allocation3], 1
    %507 = vsyncpa %s506, 1
    %508 = vsyncpa [#allocation5], 1
    %s509 = scalar_lea.sflag [#allocation5], 1
    %510 = vsyncpa %s509, 1

</llo_original>
